<compile_context>
chip_gen: v5e
topology: v5e:2x2
jax: 0.10.0
libtpu: 0.0.40
codegen_flags: <defaults>
</compile_context>

<pallas_src>
import jax
import jax.numpy as jnp
from jax.experimental import pallas as pl
from jax.experimental.pallas import tpu as pltpu

HIDDEN = 32        # backbone output channels
NUM_OUT = 4        # head output channels
MAX_TILE = 8192    # pixels (lanes) per grid step; multiple of 128


def _round_up(x, m):
    return (x + m - 1) // m * m


def _make_fused_kernel(mxu_dtype):
    def _fused_kernel(x_ref, w1_ref, b1_ref, w2_ref, b2_ref, o_ref):
        # x_ref : (3, TILE)        channels on sublanes, pixels on lanes
        # w1_ref: (HIDDEN, 3)      normalization already folded in (f32)
        # b1_ref: (HIDDEN, 1)
        # w2_ref: (NUM_OUT, HIDDEN)
        # b2_ref: (NUM_OUT, 1)
        # o_ref : (NUM_OUT, TILE)  lane-dense f32 output
        x = x_ref[...].astype(jnp.float32)                 # (3, T)
        w1 = w1_ref[...]                                   # (HIDDEN, 3)

        # Layer 1 (K=3) on the VPU: three broadcast multiply-adds per hidden
        # channel.  Keeps the tiny-K matmul off the MXU, which would be <3%
        # utilized (and would double the vmatmul push/pop traffic).
        h = w1[:, 0:1] * x[0:1, :]
        h = h + w1[:, 1:2] * x[1:2, :]
        h = h + w1[:, 2:3] * x[2:3, :]
        h = jnp.maximum(h + b1_ref[...], 0.0)              # (HIDDEN, T), ReLU

        # Layer 2 (K=32) on the MXU.  bf16 operands when the caller supplied
        # bf16 images; f32 accumulation either way.
        o = jnp.dot(w2_ref[...].astype(mxu_dtype), h.astype(mxu_dtype),
                    preferred_element_type=jnp.float32)
        o_ref[...] = (o + b2_ref[...]).astype(o_ref.dtype)

    return _fused_kernel


def model_forward(images_nchw, params, *, max_tile=MAX_TILE):
    """images_nchw: [B, 3, H, W] (f32 or bf16) -> outputs [B, NUM_OUT, H, W] f32."""
    B, C, H, W = images_nchw.shape
    assert C == 3
    n_hw = H * W

    # Lane-aligned tile; NO activation padding.  The grid is cdiv-shaped and
    # Pallas masks the ragged last block (only the valid output region is
    # written back), so the wrapper pad + slice HBM passes are gone.
    tile = min(max_tile, _round_up(n_hw, 128))
    if B == 1:
        # v7x has two TensorCores; with a single image make sure the parallel
        # pixel axis has at least two grid points so both cores get work.
        tile = min(tile, max(128, _round_up(-(-n_hw // 2), 128)))
    n_tiles = pl.cdiv(n_hw, tile)

    x = images_nchw.reshape(B, C, n_hw)        # NCHW consumed directly (free)

    # Fold Normalize into the first 1x1 conv:  (x - mean)/std @ w1 + b1
    #   == x @ (w1/std[:,None]) + (b1 - (mean/std) @ w1)
    mean = params["mean"]
    std = params["std"]
    w1 = params["w1"]                                    # (3, HIDDEN)
    b1 = params["b1"]                                    # (HIDDEN,)
    w1t = (w1 / std[:, None]).T                          # (HIDDEN, 3)
    b1c = (b1 - (mean / std) @ w1).reshape(HIDDEN, 1)    # (HIDDEN, 1)
    w2t = params["w2"].T                                 # (NUM_OUT, HIDDEN)
    b2c = params["b2"].reshape(NUM_OUT, 1)               # (NUM_OUT, 1)

    mxu_dtype = jnp.bfloat16 if images_nchw.dtype == jnp.bfloat16 else jnp.float32

    out_flat = pl.pallas_call(
        _make_fused_kernel(mxu_dtype),
        out_shape=jax.ShapeDtypeStruct((B, NUM_OUT, n_hw), jnp.float32),
        grid_spec=pltpu.PrefetchScalarGridSpec(
            num_scalar_prefetch=0,
            grid=(B, n_tiles),
            in_specs=[
                pl.BlockSpec((pl.Squeezed(), C, tile), lambda b, i: (b, 0, i)),
                pl.BlockSpec((HIDDEN, C), lambda b, i: (0, 0)),        # w1t
                pl.BlockSpec((HIDDEN, 1), lambda b, i: (0, 0)),        # b1
                pl.BlockSpec((NUM_OUT, HIDDEN), lambda b, i: (0, 0)),  # w2t
                pl.BlockSpec((NUM_OUT, 1), lambda b, i: (0, 0)),       # b2
            ],
            out_specs=pl.BlockSpec(
                (pl.Squeezed(), NUM_OUT, tile), lambda b, i: (b, 0, i)
            ),
        ),
        compiler_params=pltpu.CompilerParams(
            dimension_semantics=("parallel", "parallel"),
        ),
    )(x, w1t, b1c, w2t, b2c)

    return out_flat.reshape(B, NUM_OUT, H, W)   # NCHW emitted directly (free)


def init_params(key):
    k1, k2, k3, k4 = jax.random.split(key, 4)
    return {
        "mean": jnp.array([0.485, 0.456, 0.406], jnp.float32),
        "std": jnp.array([0.229, 0.224, 0.225], jnp.float32),
        "w1": jax.random.normal(k1, (3, HIDDEN), jnp.float32) * 0.1,
        "b1": jax.random.normal(k2, (HIDDEN,), jnp.float32) * 0.01,
        "w2": jax.random.normal(k3, (HIDDEN, NUM_OUT), jnp.float32) * 0.1,
        "b2": jax.random.normal(k4, (NUM_OUT,), jnp.float32) * 0.01,
    }


def _reference(images_nchw, p):
    # pure-JAX f32 reference (explicit normalize + NHWC matmuls)
    x = images_nchw.astype(jnp.float32)
    x = (x - p["mean"].reshape(1, 3, 1, 1)) / p["std"].reshape(1, 3, 1, 1)
    x = jnp.transpose(x, (0, 2, 3, 1))                      # NHWC
    h = jnp.maximum(x @ p["w1"] + p["b1"], 0.0)
    o = h @ p["w2"] + p["b2"]
    return jnp.transpose(o, (0, 3, 1, 2))


if __name__ == "__main__":
    key = jax.random.PRNGKey(0)
    kp, kx = jax.random.split(key)
    params = init_params(kp)

    # --- f32 path: full-precision semantics, tight tolerance ---
    B, C, H, W = 2, 3, 16, 16
    images = jax.random.uniform(kx, (B, C, H, W), jnp.float32)   # image-like [0,1)
    out = jax.block_until_ready(model_forward(images, params))
    ref = _reference(images, params)
    assert out.shape == (B, NUM_OUT, H, W)
    assert jnp.allclose(out, ref, atol=1e-4, rtol=1e-4)

    # --- bf16 path: caller provides bf16 images (half the input HBM bytes) ---
    images_bf16 = images.astype(jnp.bfloat16)
    out_bf16 = jax.block_until_ready(model_forward(images_bf16, params))
    assert out_bf16.shape == (B, NUM_OUT, H, W)
    assert jnp.allclose(out_bf16, ref, atol=2e-2, rtol=2e-2)

    # --- ragged spatial size (B==1) exercises cdiv grid + masked last tile ---
    images2 = jax.random.uniform(jax.random.PRNGKey(1), (1, C, 10, 13), jnp.float32)
    out2 = jax.block_until_ready(model_forward(images2, params))
    ref2 = _reference(images2, params)
    assert out2.shape == (1, NUM_OUT, 10, 13)
    assert jnp.allclose(out2, ref2, atol=1e-4, rtol=1e-4)

    print("KERNEL_OK")
</pallas_src>

<mosaic_0001>
module attributes {stable_mosaic.version = 11 : i64} {
  func.func @_fused_kernel(%arg0: i32, %arg1: i32, %arg2: memref<1x3x256xf32, #tpu.memory_space<vmem>>, %arg3: memref<32x3xf32, #tpu.memory_space<vmem>>, %arg4: memref<32x1xf32, #tpu.memory_space<vmem>>, %arg5: memref<4x32xf32, #tpu.memory_space<vmem>>, %arg6: memref<4x1xf32, #tpu.memory_space<vmem>>, %arg7: memref<1x4x256xf32, #tpu.memory_space<vmem>>) attributes {dimension_semantics = [#tpu.dimension_semantics<parallel>, #tpu.dimension_semantics<parallel>], iteration_bounds = array<i64: 2, 1>, scalar_prefetch = 0 : i64, scratch_operands = 0 : i64, tpu.core_type = #tpu.core_type<tc>, window_params = [{transform_indices = @transform_0, window_bounds = array<i64: 1, 3, 256>}, {pipeline_mode = #tpu.pipeline_mode<synchronous>, transform_indices = @transform_1, window_bounds = array<i64: 32, 3>}, {pipeline_mode = #tpu.pipeline_mode<synchronous>, transform_indices = @transform_2, window_bounds = array<i64: 32, 1>}, {pipeline_mode = #tpu.pipeline_mode<synchronous>, transform_indices = @transform_3, window_bounds = array<i64: 4, 32>}, {pipeline_mode = #tpu.pipeline_mode<synchronous>, transform_indices = @transform_4, window_bounds = array<i64: 4, 1>}, {transform_indices = @transform_5, window_bounds = array<i64: 1, 4, 256>}]} {
    %c0 = arith.constant 0 : index
    %c0_0 = arith.constant 0 : index
    %c0_1 = arith.constant 0 : index
    %0 = vector.load %arg2[%c0, %c0_0, %c0_1] : memref<1x3x256xf32, #tpu.memory_space<vmem>>, vector<1x3x256xf32>
    %1 = vector.shape_cast %0 : vector<1x3x256xf32> to vector<3x256xf32>
    %c0_2 = arith.constant 0 : index
    %c0_3 = arith.constant 0 : index
    %2 = vector.load %arg3[%c0_2, %c0_3] : memref<32x3xf32, #tpu.memory_space<vmem>>, vector<32x3xf32>
    %3 = vector.extract_strided_slice %2 {offsets = [0, 0], sizes = [32, 1], strides = [1, 1]} : vector<32x3xf32> to vector<32x1xf32>
    %4 = vector.extract_strided_slice %1 {offsets = [0, 0], sizes = [1, 256], strides = [1, 1]} : vector<3x256xf32> to vector<1x256xf32>
    %5 = vector.broadcast %3 : vector<32x1xf32> to vector<32x256xf32>
    %6 = vector.broadcast %4 : vector<1x256xf32> to vector<32x256xf32>
    %7 = arith.mulf %5, %6 : vector<32x256xf32>
    %8 = vector.extract_strided_slice %2 {offsets = [0, 1], sizes = [32, 1], strides = [1, 1]} : vector<32x3xf32> to vector<32x1xf32>
    %9 = vector.extract_strided_slice %1 {offsets = [1, 0], sizes = [1, 256], strides = [1, 1]} : vector<3x256xf32> to vector<1x256xf32>
    %10 = vector.broadcast %8 : vector<32x1xf32> to vector<32x256xf32>
    %11 = vector.broadcast %9 : vector<1x256xf32> to vector<32x256xf32>
    %12 = arith.mulf %10, %11 : vector<32x256xf32>
    %13 = arith.addf %7, %12 : vector<32x256xf32>
    %14 = vector.extract_strided_slice %2 {offsets = [0, 2], sizes = [32, 1], strides = [1, 1]} : vector<32x3xf32> to vector<32x1xf32>
    %15 = vector.extract_strided_slice %1 {offsets = [2, 0], sizes = [1, 256], strides = [1, 1]} : vector<3x256xf32> to vector<1x256xf32>
    %16 = vector.broadcast %14 : vector<32x1xf32> to vector<32x256xf32>
    %17 = vector.broadcast %15 : vector<1x256xf32> to vector<32x256xf32>
    %18 = arith.mulf %16, %17 : vector<32x256xf32>
    %19 = arith.addf %13, %18 : vector<32x256xf32>
    %c0_4 = arith.constant 0 : index
    %c0_5 = arith.constant 0 : index
    %20 = vector.load %arg4[%c0_4, %c0_5] : memref<32x1xf32, #tpu.memory_space<vmem>>, vector<32x1xf32>
    %21 = vector.broadcast %20 : vector<32x1xf32> to vector<32x256xf32>
    %22 = arith.addf %19, %21 : vector<32x256xf32>
    %cst = arith.constant 0.000000e+00 : f32
    %23 = vector.broadcast %cst : f32 to vector<32x256xf32>
    %24 = arith.maximumf %22, %23 : vector<32x256xf32>
    %c0_6 = arith.constant 0 : index
    %c0_7 = arith.constant 0 : index
    %25 = vector.load %arg5[%c0_6, %c0_7] : memref<4x32xf32, #tpu.memory_space<vmem>>, vector<4x32xf32>
    %cst_8 = arith.constant dense<0.000000e+00> : vector<4x256xf32>
    %26 = tpu.matmul %25, %24, %cst_8 {dimension_numbers = #tpu.dot_dimension_numbers<[1], [0], [0], [1], [0, 0, 1, 1], [], []>} : vector<4x32xf32>, vector<32x256xf32>, vector<4x256xf32> -> vector<4x256xf32>
    %c0_9 = arith.constant 0 : index
    %c0_10 = arith.constant 0 : index
    %27 = vector.load %arg6[%c0_9, %c0_10] : memref<4x1xf32, #tpu.memory_space<vmem>>, vector<4x1xf32>
    %28 = vector.broadcast %27 : vector<4x1xf32> to vector<4x256xf32>
    %29 = arith.addf %26, %28 : vector<4x256xf32>
    %c0_11 = arith.constant 0 : index
    %c0_12 = arith.constant 0 : index
    %c0_13 = arith.constant 0 : index
    %30 = vector.load %arg7[%c0_11, %c0_12, %c0_13] : memref<1x4x256xf32, #tpu.memory_space<vmem>>, vector<1x4x256xf32>
    %31 = vector.shape_cast %30 : vector<1x4x256xf32> to vector<4x256xf32>
    %32 = vector.shape_cast %29 : vector<4x256xf32> to vector<1x4x256xf32>
    tpu.vector_store %arg7[%c0_11, %c0_12, %c0_13], %32 {strides = array<i32>} : memref<1x4x256xf32, #tpu.memory_space<vmem>>, vector<1x4x256xf32>,
    return
  }
  func.func @transform_0(%arg0: i32, %arg1: i32) -> (i32, i32, i32) {
    %c0_i32 = arith.constant 0 : i32
    %c0_i32_0 = arith.constant 0 : i32
    return %arg0, %c0_i32, %arg1 : i32, i32, i32
  }
  func.func @transform_1(%arg0: i32, %arg1: i32) -> (i32, i32) {
    %c0_i32 = arith.constant 0 : i32
    %c0_i32_0 = arith.constant 0 : i32
    %c0_i32_1 = arith.constant 0 : i32
    return %c0_i32, %c0_i32_0 : i32, i32
  }
  func.func @transform_2(%arg0: i32, %arg1: i32) -> (i32, i32) {
    %c0_i32 = arith.constant 0 : i32
    %c0_i32_0 = arith.constant 0 : i32
    %c0_i32_1 = arith.constant 0 : i32
    return %c0_i32, %c0_i32_0 : i32, i32
  }
  func.func @transform_3(%arg0: i32, %arg1: i32) -> (i32, i32) {
    %c0_i32 = arith.constant 0 : i32
    %c0_i32_0 = arith.constant 0 : i32
    %c0_i32_1 = arith.constant 0 : i32
    return %c0_i32, %c0_i32_0 : i32, i32
  }
  func.func @transform_4(%arg0: i32, %arg1: i32) -> (i32, i32) {
    %c0_i32 = arith.constant 0 : i32
    %c0_i32_0 = arith.constant 0 : i32
    %c0_i32_1 = arith.constant 0 : i32
    return %c0_i32, %c0_i32_0 : i32, i32
  }
  func.func @transform_5(%arg0: i32, %arg1: i32) -> (i32, i32, i32) {
    %c0_i32 = arith.constant 0 : i32
    %c0_i32_0 = arith.constant 0 : i32
    return %arg0, %c0_i32, %arg1 : i32, i32, i32
  }
}

</mosaic_0001>

<llo_original>
// kernel: tpu_custom_call.1
$region0: #{tpu_custom_call.1}
  #allocation0 [shape = 'u32[]', space=smem, size = 0x4, offset = 0x4, fixed_abs, tag = 'smem constant byte address 0x4 - core index']
  #allocation1 [shape = 'u32[72,128]{1,0:T(1,128)}', space=vmem, size = 0x9000, scoped, tag = 'internal scratch']
  %s0 = inlined_call_operand.vmem [shape: f32[2,3,256], index: 0, kind: input, shape index: {}]
  %s1 = inlined_call_operand.vmem [shape: f32[32,3], index: 1, kind: input, shape index: {}]
  %s2 = inlined_call_operand.vmem [shape: f32[32,1], index: 2, kind: input, shape index: {}]
  %s3 = inlined_call_operand.vmem [shape: f32[4,32], index: 3, kind: input, shape index: {}]
  %s4 = inlined_call_operand.vmem [shape: f32[4,1], index: 4, kind: input, shape index: {}]
  %s5 = inlined_call_operand.hbm [shape: f32[2,4,256], index: 5, kind: output, shape index: {}]
  %s6 = sld [smem:[#allocation0]]
  $region53: #{tpu_custom_call.1} parent=0
    _
  %s8 = ssub.s32 1, %s6
  %s9 = scalar_select 0, %s8, %s6
  $region1: #{tpu_custom_call.1} parent=0
    #allocation2 [shape = 'u8[8192]{0}', space=vmem, size = 0x2000, scoped, tag = 'output window, operand 0']
    #allocation3 [shape = 's32[2]{0}', space=sflag, size = 0x8, scoped, tag = 'scoped memory for tpu_custom_call.1']
    %10 = vsyncpa [#allocation3], 0
    %s11 = scalar_lea.sflag [#allocation3], 1
    %12 = vsyncpa %s11, 0
    loop: start=0, step=1, limit=4
    $region2: #{tpu_custom_call.1} parent=1 // loop_pre_header
      _
    $region3: #{tpu_custom_call.1} parent=1 // loop_header
      %s14 = sphi 0, %s18
      %p15 = scmp.ge.s32.totalorder %s14, 4
      %s21 = sphi 0, %s33
      %s22 = sphi 0, %s29
      %s23 = sphi 0, %s21
      %s24 = sphi 0, %s22
      %s25 = sphi 0, %s23
      %s26 = sphi 0, %s24
      %s38 = sphi 0, %s40
      %s41 = sphi 0, %s38
      %s42 = sphi 0, %s41
      %s58 = sphi 0, %s42
      %s62 = sphi 0, %s62
      %s64 = sphi 0, %s62
      %s65 = sphi 0, %s64
      %s79 = sphi 0, %s65
      %s83 = sphi 0, %s83
      %s85 = sphi 0, %s83
      %s86 = sphi 0, %s85
      %s100 = sphi 0, %s86
      %s104 = sphi 0, %s104
      %s106 = sphi 0, %s104
      %s107 = sphi 0, %s106
      %s121 = sphi 0, %s107
      %s125 = sphi 0, %s125
      %s127 = sphi 0, %s125
      %s128 = sphi 0, %s127
      %s142 = sphi 0, %s128
      %s150 = sphi 0, %s152
      %s153 = sphi 0, %s150
      %s154 = sphi 0, %s153
      %s170 = sphi 0, %s154
    $region4: #{tpu_custom_call.1} parent=1 // loop_header_branch
      %17 = sbr.rel (%p15) target = $region8
    $region5: #{tpu_custom_call.1} parent=1 // loop_body
      %s19 = ssub.s32 %s14, 1
      %s20 = ssub.s32 %s14, 2
      %s27 = sadd.s32 1, %s22
      %p28 = scmp.ge.s32.totalorder %s27, 1
      %s29 = scalar_select %p28, 0, %s27
      %s30 = sadd.s32 1, %s21
      %s31 = scalar_select %p28, %s30, %s21
      %p32 = scmp.ge.s32.totalorder %s31, 2
      %s33 = scalar_select %p32, 0, %s31
      %s34 = ssub.s32 %s21, %s33
      %s35 = ssub.s32 %s22, %s29
      %s36 = sor.u32 %s34, %s35
      %p37 = scmp.eq.s32.totalorder %s36, 0
      %s39 = sadd.s32 %s38, 1
      %s40 = scalar_select %p37, %s38, %s39
      %p43 = pneg %p37
      %p44 = scmp.eq.s32.totalorder %s14, 1
      %p45 = por %p43, %p44
      %p46 = scmp.ne.s32.totalorder %s38, %s41
      %p47 = scmp.eq.s32.totalorder %s14, 0
      %p48 = por %p46, %p47
      %p49 = scmp.ne.s32.totalorder %s38, %s41
      %p50 = scmp.eq.s32.totalorder %s19, 1
      %p51 = por %p49, %p50
      %p52 = scmp.ne.s32.totalorder %s41, %s42
      %p53 = scmp.eq.s32.totalorder %s19, 0
      %p54 = por %p52, %p53
      %p55 = scmp.ne.s32.totalorder %s41, %s42
      %p56 = scmp.eq.s32.totalorder %s20, 1
      %p57 = por %p55, %p56
      %p59 = scmp.ne.s32.totalorder %s42, %s58
      %p60 = scmp.eq.s32.totalorder %s20, 0
      %p61 = por %p59, %p60
      %s63 = sadd.s32 %s62, 1
      %p66 = scmp.eq.s32.totalorder %s14, 1
      %p67 = scmp.ne.s32.totalorder %s62, %s64
      %p68 = scmp.eq.s32.totalorder %s14, 0
      %p69 = por %p67, %p68
      %p70 = scmp.ne.s32.totalorder %s62, %s64
      %p71 = scmp.eq.s32.totalorder %s19, 1
      %p72 = por %p70, %p71
      %p73 = scmp.ne.s32.totalorder %s64, %s65
      %p74 = scmp.eq.s32.totalorder %s19, 0
      %p75 = por %p73, %p74
      %p76 = scmp.ne.s32.totalorder %s64, %s65
      %p77 = scmp.eq.s32.totalorder %s20, 1
      %p78 = por %p76, %p77
      %p80 = scmp.ne.s32.totalorder %s65, %s79
      %p81 = scmp.eq.s32.totalorder %s20, 0
      %p82 = por %p80, %p81
      %s84 = sadd.s32 %s83, 1
      %p87 = scmp.eq.s32.totalorder %s14, 1
      %p88 = scmp.ne.s32.totalorder %s83, %s85
      %p89 = scmp.eq.s32.totalorder %s14, 0
      %p90 = por %p88, %p89
      %p91 = scmp.ne.s32.totalorder %s83, %s85
      %p92 = scmp.eq.s32.totalorder %s19, 1
      %p93 = por %p91, %p92
      %p94 = scmp.ne.s32.totalorder %s85, %s86
      %p95 = scmp.eq.s32.totalorder %s19, 0
      %p96 = por %p94, %p95
      %p97 = scmp.ne.s32.totalorder %s85, %s86
      %p98 = scmp.eq.s32.totalorder %s20, 1
      %p99 = por %p97, %p98
      %p101 = scmp.ne.s32.totalorder %s86, %s100
      %p102 = scmp.eq.s32.totalorder %s20, 0
      %p103 = por %p101, %p102
      %s105 = sadd.s32 %s104, 1
      %p108 = scmp.eq.s32.totalorder %s14, 1
      %p109 = scmp.ne.s32.totalorder %s104, %s106
      %p110 = scmp.eq.s32.totalorder %s14, 0
      %p111 = por %p109, %p110
      %p112 = scmp.ne.s32.totalorder %s104, %s106
      %p113 = scmp.eq.s32.totalorder %s19, 1
      %p114 = por %p112, %p113
      %p115 = scmp.ne.s32.totalorder %s106, %s107
      %p116 = scmp.eq.s32.totalorder %s19, 0
      %p117 = por %p115, %p116
      %p118 = scmp.ne.s32.totalorder %s106, %s107
      %p119 = scmp.eq.s32.totalorder %s20, 1
      %p120 = por %p118, %p119
      %p122 = scmp.ne.s32.totalorder %s107, %s121
      %p123 = scmp.eq.s32.totalorder %s20, 0
      %p124 = por %p122, %p123
      %s126 = sadd.s32 %s125, 1
      %p129 = scmp.eq.s32.totalorder %s14, 1
      %p130 = scmp.ne.s32.totalorder %s125, %s127
      %p131 = scmp.eq.s32.totalorder %s14, 0
      %p132 = por %p130, %p131
      %p133 = scmp.ne.s32.totalorder %s125, %s127
      %p134 = scmp.eq.s32.totalorder %s19, 1
      %p135 = por %p133, %p134
      %p136 = scmp.ne.s32.totalorder %s127, %s128
      %p137 = scmp.eq.s32.totalorder %s19, 0
      %p138 = por %p136, %p137
      %p139 = scmp.ne.s32.totalorder %s127, %s128
      %p140 = scmp.eq.s32.totalorder %s20, 1
      %p141 = por %p139, %p140
      %p143 = scmp.ne.s32.totalorder %s128, %s142
      %p144 = scmp.eq.s32.totalorder %s20, 0
      %p145 = por %p143, %p144
      %s146 = ssub.s32 %s21, %s33
      %s147 = ssub.s32 %s22, %s29
      %s148 = sor.u32 %s146, %s147
      %p149 = scmp.eq.s32.totalorder %s148, 0
      %s151 = sadd.s32 %s150, 1
      %s152 = scalar_select %p149, %s150, %s151
      %p155 = pneg %p149
      %p156 = scmp.eq.s32.totalorder %s14, 1
      %p157 = por %p155, %p156
      %p158 = scmp.ne.s32.totalorder %s150, %s153
      %p159 = scmp.eq.s32.totalorder %s14, 0
      %p160 = por %p158, %p159
      %p161 = scmp.ne.s32.totalorder %s150, %s153
      %p162 = scmp.eq.s32.totalorder %s19, 1
      %p163 = por %p161, %p162
      %p164 = scmp.ne.s32.totalorder %s153, %s154
      %p165 = scmp.eq.s32.totalorder %s19, 0
      %p166 = por %p164, %p165
      %p167 = scmp.ne.s32.totalorder %s153, %s154
      %p168 = scmp.eq.s32.totalorder %s20, 1
      %p169 = por %p167, %p168
      %p171 = scmp.ne.s32.totalorder %s154, %s170
      %p172 = scmp.eq.s32.totalorder %s20, 0
      %p173 = por %p171, %p172
      %p174 = scmp.le.s32.totalorder 1, %s14
      %p175 = scmp.lt.s32.totalorder %s14, 3
      %p176 = pnand %p174, %p175
      %p177 = pneg %p176
      // Predicated region
      $region9: #{tpu_custom_call.1} parent=5 // pred_check
        _
      $region10: #{tpu_custom_call.1} parent=5 // pred_check_branch
        %179 = sbr.rel (%p176) target = $region12
      $region11: #{tpu_custom_call.1} parent=5 // pred_region
        %s180 = ssub.s32 %s14, 1
        // Predicated region
        $region13: #{tpu_custom_call.1} parent=11 // pred_check
          %p181 = pneg %p75
        $region14: #{tpu_custom_call.1} parent=11 // pred_check_branch
          %183 = sbr.rel (%p181) target = $region16
        $region15: #{tpu_custom_call.1} parent=11 // pred_region
          _
        $region16: #{tpu_custom_call.1} parent=11 // pred_fallthru
          _
        // Predicated region
        $region17: #{tpu_custom_call.1} parent=11 // pred_check
          %p184 = pneg %p96
        $region18: #{tpu_custom_call.1} parent=11 // pred_check_branch
          %186 = sbr.rel (%p184) target = $region20
        $region19: #{tpu_custom_call.1} parent=11 // pred_region
          _
        $region20: #{tpu_custom_call.1} parent=11 // pred_fallthru
          _
        // Predicated region
        $region21: #{tpu_custom_call.1} parent=11 // pred_check
          %p187 = pneg %p117
        $region22: #{tpu_custom_call.1} parent=11 // pred_check_branch
          %189 = sbr.rel (%p187) target = $region24
        $region23: #{tpu_custom_call.1} parent=11 // pred_region
          _
        $region24: #{tpu_custom_call.1} parent=11 // pred_fallthru
          _
        // Predicated region
        $region25: #{tpu_custom_call.1} parent=11 // pred_check
          %p190 = pneg %p138
        $region26: #{tpu_custom_call.1} parent=11 // pred_check_branch
          %192 = sbr.rel (%p190) target = $region28
        $region27: #{tpu_custom_call.1} parent=11 // pred_region
          _
        $region28: #{tpu_custom_call.1} parent=11 // pred_fallthru
          _
      $region12: #{tpu_custom_call.1} parent=5 // pred_fallthru
        _
      %p193 = scmp.lt.s32.totalorder %s14, 2
      // Predicated region
      $region29: #{tpu_custom_call.1} parent=5 // pred_check
        %p194 = pneg %p193
      $region30: #{tpu_custom_call.1} parent=5 // pred_check_branch
        %196 = sbr.rel (%p194) target = $region32
      $region31: #{tpu_custom_call.1} parent=5 // pred_region
        // Predicated region
        $region33: #{tpu_custom_call.1} parent=31 // pred_check
          %p197 = pneg %p48
        $region34: #{tpu_custom_call.1} parent=31 // pred_check_branch
          %199 = sbr.rel (%p197) target = $region36
        $region35: #{tpu_custom_call.1} parent=31 // pred_region
          %s200 = smul.u32 2, %s22
          %p201 = scmp.lt.s32.totalorder %s21, 1
          %s202 = scalar_select %p201, %s21, 1
          %p203 = scmp.lt.s32.totalorder %s200, 1
          %s204 = scalar_select %p203, %s200, 1
          %s205 = smul.addr %s202, 2
          %s206 = sadd.s32 %s204, %s205
          %s207 = smul.addr %s206, 4
          %s208 = scalar_lea.vmem %s0, %s207
          %s209 = smul.u32 2, %s22
        $region36: #{tpu_custom_call.1} parent=31 // pred_fallthru
          _
      $region32: #{tpu_custom_call.1} parent=5 // pred_fallthru
        _
      %p210 = scmp.le.s32.totalorder 1, %s14
      %p211 = scmp.lt.s32.totalorder %s14, 3
      %p212 = pnand %p210, %p211
      %p213 = pneg %p212
      // Predicated region
      $region37: #{tpu_custom_call.1} parent=5 // pred_check
        _
      $region38: #{tpu_custom_call.1} parent=5 // pred_check_branch
        %215 = sbr.rel (%p212) target = $region40
      $region39: #{tpu_custom_call.1} parent=5 // pred_region
        %s216 = ssub.s32 %s14, 1
        %s217 = smul.u32 2, %s24
        %p218 = scmp.lt.s32.totalorder %s23, 1
        %s219 = scalar_select %p218, %s23, 1
        %p220 = scmp.lt.s32.totalorder %s217, 1
        %s221 = scalar_select %p220, %s217, 1
        %s222 = smul.addr %s219, 2
        %s223 = sadd.s32 %s221, %s222
        %s224 = smul.addr %s223, 4
        %s225 = scalar_lea.vmem %s0, %s224
        %p226 = pneg %p54
        %p227 = pneg %p51
        %p228 = pneg %p75
        %p229 = pneg %p72
        %p230 = pneg %p96
        %p231 = pneg %p93
        %p232 = pneg %p117
        %p233 = pneg %p114
        %p234 = pneg %p138
        %p235 = pneg %p135
        %p236 = pneg %p166
        %p237 = pneg %p163
        %s238 = sand.u32 %s153, 1
        %s239 = scalar_lea.sflag [#allocation3], %s238
        %s240 = sand.u32 %s153, 1
        %s241 = smul.addr %s240, 8
        %s242 = scalar_lea.vmem [#allocation2], %s241
        %s243 = smul.u32 2, %s24
        %p244 = scmp.lt.s32.totalorder %s23, 1
        %s245 = scalar_select %p244, %s23, 1
        %p246 = scmp.lt.s32.totalorder %s243, 1
        %s247 = scalar_select %p246, %s243, 1
        %s248 = smul.addr %s245, 2
        %s249 = sadd.s32 %s247, %s248
        %s250 = smul.addr %s249, 4
        %s251 = scalar_lea.vmem %s0, %s250
        %s252 = smul.u32 2, %s24
        %s253 = smul.u32 2, %s24
        %v254 = vld [vmem:[%s251] sm:$0x77]
        %v255 = vld [vmem:[%s1] sm:$0xff]
        %v256 = vld [vmem:[%s1 + $0x8] sm:$0xff]
        %v257 = vld [vmem:[%s1 + $0x10] sm:$0xff]
        %v258 = vld [vmem:[%s1 + $0x18] sm:$0xff]
        %260 = vset.pattern.permute.xlu0 0
        %261 = vperm.xlu0 %260, %v255
        %v262 = vpop.permute.xlu0 %261
        %265 = vset.pattern.permute.xlu0 0
        %266 = vperm.xlu0 %265, %v256
        %v267 = vpop.permute.xlu0 %266
        %270 = vset.pattern.permute.xlu0 0
        %271 = vperm.xlu0 %270, %v257
        %v272 = vpop.permute.xlu0 %271
        %275 = vset.pattern.permute.xlu0 0
        %276 = vperm.xlu0 %275, %v258
        %v277 = vpop.permute.xlu0 %276
        %v280 = vperm.slane %v254, 0
        %v281 = vperm.slane %v254, 4
        %v284 = vperm.slane %v280, 0
        %v285 = vperm.slane %v281, 0
        %v286 = vmul.f32 %v262, %v284
        %v287 = vmul.f32 %v262, %v285
        %v288 = vmul.f32 %v267, %v284
        %v289 = vmul.f32 %v267, %v285
        %v290 = vmul.f32 %v272, %v284
        %v291 = vmul.f32 %v272, %v285
        %v292 = vmul.f32 %v277, %v284
        %v293 = vmul.f32 %v277, %v285
        %294 = vset.pattern.permute.xlu0 1
        %295 = vperm.xlu0 %294, %v255
        %v296 = vpop.permute.xlu0 %295
        %298 = vset.pattern.permute.xlu0 1
        %299 = vperm.xlu0 %298, %v256
        %v300 = vpop.permute.xlu0 %299
        %302 = vset.pattern.permute.xlu0 1
        %303 = vperm.xlu0 %302, %v257
        %v304 = vpop.permute.xlu0 %303
        %306 = vset.pattern.permute.xlu0 1
        %307 = vperm.xlu0 %306, %v258
        %v308 = vpop.permute.xlu0 %307
        %v310 = vperm.slane %v254, 1
        %v311 = vperm.slane %v254, 5
        %v314 = vperm.slane %v310, 1
        %v315 = vperm.slane %v311, 1
        %v316 = vmul.f32 %v296, %v314
        %v317 = vmul.f32 %v296, %v315
        %v318 = vmul.f32 %v300, %v314
        %v319 = vmul.f32 %v300, %v315
        %v320 = vmul.f32 %v304, %v314
        %v321 = vmul.f32 %v304, %v315
        %v322 = vmul.f32 %v308, %v314
        %v323 = vmul.f32 %v308, %v315
        %v324 = vadd.f32 %v286, %v316
        %v325 = vadd.f32 %v287, %v317
        %v326 = vadd.f32 %v288, %v318
        %v327 = vadd.f32 %v289, %v319
        %v328 = vadd.f32 %v290, %v320
        %v329 = vadd.f32 %v291, %v321
        %v330 = vadd.f32 %v292, %v322
        %v331 = vadd.f32 %v293, %v323
        %332 = vset.pattern.permute.xlu0 2
        %333 = vperm.xlu0 %332, %v255
        %v334 = vpop.permute.xlu0 %333
        %336 = vset.pattern.permute.xlu0 2
        %337 = vperm.xlu0 %336, %v256
        %v338 = vpop.permute.xlu0 %337
        %340 = vset.pattern.permute.xlu0 2
        %341 = vperm.xlu0 %340, %v257
        %v342 = vpop.permute.xlu0 %341
        %344 = vset.pattern.permute.xlu0 2
        %345 = vperm.xlu0 %344, %v258
        %v346 = vpop.permute.xlu0 %345
        %v348 = vperm.slane %v254, 2
        %v349 = vperm.slane %v254, 6
        %v352 = vperm.slane %v348, 2
        %v353 = vperm.slane %v349, 2
        %v354 = vmul.f32 %v334, %v352
        %v355 = vmul.f32 %v334, %v353
        %v356 = vmul.f32 %v338, %v352
        %v357 = vmul.f32 %v338, %v353
        %v358 = vmul.f32 %v342, %v352
        %v359 = vmul.f32 %v342, %v353
        %v360 = vmul.f32 %v346, %v352
        %v361 = vmul.f32 %v346, %v353
        %v362 = vadd.f32 %v324, %v354
        %v363 = vadd.f32 %v325, %v355
        %v364 = vadd.f32 %v326, %v356
        %v365 = vadd.f32 %v327, %v357
        %v366 = vadd.f32 %v328, %v358
        %v367 = vadd.f32 %v329, %v359
        %v368 = vadd.f32 %v330, %v360
        %v369 = vadd.f32 %v331, %v361
        %v370 = vld [vmem:[%s2] sm:$0xff]
        %v371 = vld [vmem:[%s2 + $0x8] sm:$0xff]
        %v372 = vld [vmem:[%s2 + $0x10] sm:$0xff]
        %v373 = vld [vmem:[%s2 + $0x18] sm:$0xff]
        %375 = vset.pattern.permute.xlu0 0
        %376 = vperm.xlu0 %375, %v370
        %v377 = vpop.permute.xlu0 %376
        %380 = vset.pattern.permute.xlu0 0
        %381 = vperm.xlu0 %380, %v371
        %v382 = vpop.permute.xlu0 %381
        %385 = vset.pattern.permute.xlu0 0
        %386 = vperm.xlu0 %385, %v372
        %v387 = vpop.permute.xlu0 %386
        %390 = vset.pattern.permute.xlu0 0
        %391 = vperm.xlu0 %390, %v373
        %v392 = vpop.permute.xlu0 %391
        %v394 = vadd.f32 %v362, %v377
        %v395 = vadd.f32 %v363, %v377
        %v396 = vadd.f32 %v364, %v382
        %v397 = vadd.f32 %v365, %v382
        %v398 = vadd.f32 %v366, %v387
        %v399 = vadd.f32 %v367, %v387
        %v400 = vadd.f32 %v368, %v392
        %v401 = vadd.f32 %v369, %v392
        %v402 = vmax.f32 %v394, 0.0
        %v403 = vmax.f32 %v395, 0.0
        %v404 = vmax.f32 %v396, 0.0
        %v405 = vmax.f32 %v397, 0.0
        %v406 = vmax.f32 %v398, 0.0
        %v407 = vmax.f32 %v399, 0.0
        %v408 = vmax.f32 %v400, 0.0
        %v409 = vmax.f32 %v401, 0.0
        %v410 = vld [vmem:[%s3] sm:$0xf]
        %v411 = vld [vmem:[%s4] sm:$0xf]
        %413 = vset.pattern.permute.xlu0 0
        %414 = vperm.xlu0 %413, %v411
        %v415 = vpop.permute.xlu0 %414
        %vm417 = vcmask 261120
        %v419 = vsel %vm417, %v410, 0
        %421 = vmatpush.msra.mxu0 0.0
        %422 = vmatpush.msra.mxu0 0.0
        %423 = vmatpush.msra.mxu0 0.0
        %424 = vmatpush.msra.mxu0 0.0
        %425 = vmatpush.msra.mxu0 0.0
        %426 = vmatpush.msra.mxu0 0.0
        %427 = vmatpush.msra.mxu0 0.0
        %428 = vmatpush.msra.mxu0 0.0
        %429 = vmatpush.msra.mxu0 0.0
        %430 = vmatpush.msra.mxu0 0.0
        %431 = vmatpush.msra.mxu0 0.0
        %432 = vmatpush.msra.mxu0 0.0
        %433 = vmatpush.msra.mxu0 %v408
        %434 = vmatpush.msra.mxu0 %v406
        %435 = vmatpush.msra.mxu0 %v404
        %436 = vmatpush.msra.mxu0 %v402
        %437 = vmatmul.f32.gmra.mxu0 %v419
        %v438 = vpop.f32.mrf.mxu0
        %v439 = vadd.f32 %v415, %v438
        %440 = vdwg.mxu0
        %441 = vmatpush.msra.mxu0 0.0
        %442 = vmatpush.msra.mxu0 0.0
        %443 = vmatpush.msra.mxu0 0.0
        %444 = vmatpush.msra.mxu0 0.0
        %445 = vmatpush.msra.mxu0 0.0
        %446 = vmatpush.msra.mxu0 0.0
        %447 = vmatpush.msra.mxu0 0.0
        %448 = vmatpush.msra.mxu0 0.0
        %449 = vmatpush.msra.mxu0 0.0
        %450 = vmatpush.msra.mxu0 0.0
        %451 = vmatpush.msra.mxu0 0.0
        %452 = vmatpush.msra.mxu0 0.0
        %453 = vmatpush.msra.mxu0 %v409
        %454 = vmatpush.msra.mxu0 %v407
        %455 = vmatpush.msra.mxu0 %v405
        %456 = vmatpush.msra.mxu0 %v403
        %457 = vmatmul.f32.gmra.mxu0 %v419
        %v458 = vpop.f32.mrf.mxu0
        %v459 = vadd.f32 %v415, %v458
        %460 = vdwg.mxu0
        %v463 = vrot.slane %v459, 4
        %vm464 = vcmask 1043456
        %v465 = vsel %vm464, %v439, %v463
        %467 = vst [vmem:[%s242] sm:$0xff] %v465
        %s468 = sand.u32 %s153, 1
        %s469 = scalar_lea.sflag [#allocation3], %s468
        %s470 = sand.u32 %s153, 1
        %s471 = smul.addr %s470, 8
        %s472 = scalar_lea.vmem [#allocation2], %s471
        // Predicated region
        $region41: #{tpu_custom_call.1} parent=39 // pred_check
          %p473 = pneg %p163
        $region42: #{tpu_custom_call.1} parent=39 // pred_check_branch
          %475 = sbr.rel (%p473) target = $region44
        $region43: #{tpu_custom_call.1} parent=39 // pred_region
          %s476 = smul.u32 2, %s24
          %478 = vsyncadd %s469, 0
          %s479 = smul.addr %s23, 2
          %s480 = sadd.s32 %s476, %s479
          %s481 = smul.addr %s480, 4
          %s482 = scalar_lea.hbm %s5, %s481
          %s484 = sshll.u32 %s472, 4
          %s485 = int_to_ptr.vmem [resolvable:$true] %s484
          %s486 = sshll.u32 %s482, 4
          %s487 = int_to_ptr.hbm [resolvable:$true] %s486
          %489 = dma.vmem_to_hbm [thread:$0]  %s485, 128, %s487, %s469
        $region44: #{tpu_custom_call.1} parent=39 // pred_fallthru
          _
      $region40: #{tpu_custom_call.1} parent=5 // pred_fallthru
        _
      %p490 = scmp.le.s32.totalorder 2, %s14
      // Predicated region
      $region45: #{tpu_custom_call.1} parent=5 // pred_check
        %p491 = pneg %p490
      $region46: #{tpu_custom_call.1} parent=5 // pred_check_branch
        %493 = sbr.rel (%p491) target = $region48
      $region47: #{tpu_custom_call.1} parent=5 // pred_region
        %s494 = ssub.s32 %s14, 2
        // Predicated region
        $region49: #{tpu_custom_call.1} parent=47 // pred_check
          %p495 = pneg %p169
        $region50: #{tpu_custom_call.1} parent=47 // pred_check_branch
          %497 = sbr.rel (%p495) target = $region52
        $region51: #{tpu_custom_call.1} parent=47 // pred_region
          %s498 = sand.u32 %s154, 1
          %s499 = scalar_lea.sflag [#allocation3], %s498
          %s500 = sand.u32 %s154, 1
          %s501 = smul.addr %s500, 8
          %s502 = scalar_lea.vmem [#allocation2], %s501
          %504 = dma.done %s499, 128
        $region52: #{tpu_custom_call.1} parent=47 // pred_fallthru
          _
      $region48: #{tpu_custom_call.1} parent=5 // pred_fallthru
        _
    $region6: #{tpu_custom_call.1} parent=1 // loop_footer
      %s18 = sadd.s32 1, %s14
    $region7: #{tpu_custom_call.1} parent=1 // loop_footer_branch
      %13 = sbr.rel target = $region3
    $region8: #{tpu_custom_call.1} parent=1 // loop_exit
      _
    %505 = vsyncpa [#allocation3], 1
    %s506 = scalar_lea.sflag [#allocation3], 1
    %507 = vsyncpa %s506, 1

</llo_original>
